<compile_context>
chip_gen: v7x
topology: tpu7x:2x2x1
jax: 0.10.0
libtpu: 0.0.40
codegen_flags: <defaults>
</compile_context>

<pallas_src>
import jax
import jax.numpy as jnp
from jax.experimental import pallas as pl
from jax.experimental.pallas import tpu as pltpu


def net_kernel(x_ref,
               w1_ref, b1_ref,
               w2_ref, b2_ref,
               wc_ref, bc_ref,
               w3_ref, b3_ref,
               o_ref):
    # Straight-line 5-matmul chain, all f32 with f32 MXU accumulation.
    # Biases stay (1, size): the sublane-broadcast add is free on the VPU and
    # avoids pinning a (tile_b, size) broadcast in vregs.
    def dense(h, w_ref, b_ref):
        return jnp.dot(h, w_ref[...], preferred_element_type=jnp.float32) + b_ref[...]

    h = jnp.maximum(dense(x_ref[...], w1_ref, b1_ref), 0.0)   # fc1 -> relu -> drop(id)
    h = jnp.maximum(dense(h, w2_ref, b2_ref), 0.0)            # fc2 -> relu -> drop(id)
    # residual (h + residual(h)) folded together with the NEXT fc2:
    #   relu((h @ (Wr+I) + br) @ W2 + b2) == relu(h @ Wc + bc)
    h = jnp.maximum(dense(h, wc_ref, bc_ref), 0.0)            # (residual + fc2) -> relu
    h = jnp.maximum(dense(h, w2_ref, b2_ref), 0.0)            # fc2 -> relu -> drop(id)
    o_ref[...] = dense(h, w3_ref, b3_ref)                     # fc3 (unpadded 4 lanes)


def _round_up(n, m):
    return (n + m - 1) // m * m


def net_forward(x, params, *, tile_b=1024, dimension_semantics=("parallel",)):
    """Run the Net forward pass. Handles arbitrary batch via a batch grid."""
    w1, b1, w2, b2, wr, br, w3, b3 = params
    batch, in_dim = x.shape
    size = w2.shape[0]
    out_dim = w3.shape[1]

    # Fold `h + residual(h)` AND the following fc2 (no nonlinearity between them)
    # into one dense in f32:  relu((h @ (Wr+I) + br) @ W2 + b2) == relu(h @ Wc + bc).
    wc = (wr + jnp.eye(size, dtype=wr.dtype)) @ w2
    bc = br @ w2 + b2

    # Batch tiling: tile_b rows per grid step (forced to a multiple of 8 for f32
    # sublane alignment); weights/biases VMEM-resident via constant index_maps.
    tile_b = max(8, _round_up(int(tile_b), 8))
    tile_b = min(tile_b, _round_up(batch, 8))
    padded_batch = _round_up(batch, tile_b)
    if padded_batch != batch:
        x = jnp.pad(x, ((0, padded_batch - batch), (0, 0)))
    grid = (padded_batch // tile_b,)

    def resident(a):
        # Full-array block, constant index_map -> fetched once, stays in VMEM.
        # (pl.Buffered(1) would drop the second pipeline buffer for these tiny
        #  operands; skipped to keep lowering maximally portable.)
        return pl.BlockSpec(a.shape, lambda i: (0, 0))

    flops = 2 * padded_batch * size * (in_dim + 3 * size + out_dim)
    bytes_accessed = int(
        x.size * x.dtype.itemsize
        + sum(a.size * a.dtype.itemsize for a in (w1, b1, w2, b2, wc, bc, w3, b3))
        + padded_batch * out_dim * 4)

    out = pl.pallas_call(
        net_kernel,
        out_shape=jax.ShapeDtypeStruct((padded_batch, out_dim), jnp.float32),
        grid=grid,
        in_specs=[
            pl.BlockSpec((tile_b, in_dim), lambda i: (i, 0)),   # x: tiled over batch
            resident(w1), resident(b1),
            resident(w2), resident(b2),
            resident(wc), resident(bc),
            resident(w3), resident(b3),
        ],
        # Unpadded (tile_b, out_dim) output block: HBM writeback is 16 B/row
        # (was 512 B/row with the 128-lane f32 pad) and the HBM side of each
        # block's store DMA is fully contiguous.
        out_specs=pl.BlockSpec((tile_b, out_dim), lambda i: (i, 0)),
        compiler_params=pltpu.CompilerParams(
            dimension_semantics=dimension_semantics),
        cost_estimate=pl.CostEstimate(flops=flops, transcendentals=0,
                                      bytes_accessed=bytes_accessed),
    )(x, w1, b1, w2, b2, wc, bc, w3, b3)

    if padded_batch != batch:
        out = out[:batch]
    return out


def init_linear(key, fan_in, fan_out):
    """PyTorch-style default Linear init: U(-1/sqrt(fan_in), 1/sqrt(fan_in))."""
    kw, kb = jax.random.split(key)
    bound = 1.0 / jnp.sqrt(jnp.float32(fan_in))
    # stored as (in, out) so the kernel can do x @ W
    w = jax.random.uniform(kw, (fan_in, fan_out), jnp.float32, -bound, bound)
    b = jax.random.uniform(kb, (1, fan_out), jnp.float32, -bound, bound)
    return w, b


def reference_forward(x, params):
    """Pure-JAX reference with the ORIGINAL (unfolded) graph for validation."""
    (w1, b1, w2, b2, wr, br, w3, b3) = params
    h = jnp.maximum(x @ w1 + b1, 0.0)
    h = jnp.maximum(h @ w2 + b2, 0.0)
    h = h + (h @ wr + br)
    h = jnp.maximum(h @ w2 + b2, 0.0)
    h = jnp.maximum(h @ w2 + b2, 0.0)
    return h @ w3 + b3


if __name__ == "__main__":
    size = 32     # hidden width of the torch module
    batch = 8

    key = jax.random.PRNGKey(0)
    kx, k1, k2, k3, kr = jax.random.split(key, 5)

    x = jax.random.normal(kx, (batch, 11), jnp.float32)

    w1, b1 = init_linear(k1, 11, size)
    w2, b2 = init_linear(k2, size, size)
    w3, b3 = init_linear(k3, size, 4)
    wr, br = init_linear(kr, size, size)
    params = (w1, b1, w2, b2, wr, br, w3, b3)

    # --- small batch (single grid step, tile_b clamps to 8) ---
    out = jax.block_until_ready(net_forward(x, params))
    ref = reference_forward(x, params)
    assert out.shape == (batch, 4)
    assert jnp.allclose(out, ref, atol=1e-4, rtol=1e-4)

    # --- medium batch exercising batch padding within one tile ---
    big_batch = 300
    xb = jax.random.normal(kx, (big_batch, 11), jnp.float32)
    out_b = jax.block_until_ready(net_forward(xb, params))
    ref_b = reference_forward(xb, params)
    assert out_b.shape == (big_batch, 4)
    assert jnp.allclose(out_b, ref_b, atol=1e-4, rtol=1e-4)

    # --- large batch exercising multiple grid steps at the default tile_b ---
    huge_batch = 2300
    xh = jax.random.normal(kx, (huge_batch, 11), jnp.float32)
    out_h = jax.block_until_ready(net_forward(xh, params, tile_b=1024))
    ref_h = reference_forward(xh, params)
    assert out_h.shape == (huge_batch, 4)
    assert jnp.allclose(out_h, ref_h, atol=1e-4, rtol=1e-4)

    print("KERNEL_OK")
</pallas_src>

<mosaic_0001>
module attributes {stable_mosaic.version = 11 : i64} {
  func.func @net_kernel(%arg0: i32, %arg1: memref<8x11xf32, #tpu.memory_space<vmem>>, %arg2: memref<11x32xf32, #tpu.memory_space<vmem>>, %arg3: memref<1x32xf32, #tpu.memory_space<vmem>>, %arg4: memref<32x32xf32, #tpu.memory_space<vmem>>, %arg5: memref<1x32xf32, #tpu.memory_space<vmem>>, %arg6: memref<32x32xf32, #tpu.memory_space<vmem>>, %arg7: memref<1x32xf32, #tpu.memory_space<vmem>>, %arg8: memref<32x4xf32, #tpu.memory_space<vmem>>, %arg9: memref<1x4xf32, #tpu.memory_space<vmem>>, %arg10: memref<8x4xf32, #tpu.memory_space<vmem>>) attributes {dimension_semantics = [#tpu.dimension_semantics<parallel>], iteration_bounds = array<i64: 1>, scalar_prefetch = 0 : i64, scratch_operands = 0 : i64, tpu.core_type = #tpu.core_type<tc>, window_params = [{transform_indices = @transform_0, window_bounds = array<i64: 8, 11>}, {pipeline_mode = #tpu.pipeline_mode<synchronous>, transform_indices = @transform_1, window_bounds = array<i64: 11, 32>}, {pipeline_mode = #tpu.pipeline_mode<synchronous>, transform_indices = @transform_2, window_bounds = array<i64: 1, 32>}, {pipeline_mode = #tpu.pipeline_mode<synchronous>, transform_indices = @transform_3, window_bounds = array<i64: 32, 32>}, {pipeline_mode = #tpu.pipeline_mode<synchronous>, transform_indices = @transform_4, window_bounds = array<i64: 1, 32>}, {pipeline_mode = #tpu.pipeline_mode<synchronous>, transform_indices = @transform_5, window_bounds = array<i64: 32, 32>}, {pipeline_mode = #tpu.pipeline_mode<synchronous>, transform_indices = @transform_6, window_bounds = array<i64: 1, 32>}, {pipeline_mode = #tpu.pipeline_mode<synchronous>, transform_indices = @transform_7, window_bounds = array<i64: 32, 4>}, {pipeline_mode = #tpu.pipeline_mode<synchronous>, transform_indices = @transform_8, window_bounds = array<i64: 1, 4>}, {transform_indices = @transform_9, window_bounds = array<i64: 8, 4>}]} {
    %c0 = arith.constant 0 : index
    %c0_0 = arith.constant 0 : index
    %0 = vector.load %arg1[%c0, %c0_0] : memref<8x11xf32, #tpu.memory_space<vmem>>, vector<8x11xf32>
    %c0_1 = arith.constant 0 : index
    %c0_2 = arith.constant 0 : index
    %1 = vector.load %arg2[%c0_1, %c0_2] : memref<11x32xf32, #tpu.memory_space<vmem>>, vector<11x32xf32>
    %cst = arith.constant dense<0.000000e+00> : vector<8x32xf32>
    %2 = tpu.matmul %0, %1, %cst {dimension_numbers = #tpu.dot_dimension_numbers<[1], [0], [0], [1], [0, 0, 1, 1], [], []>} : vector<8x11xf32>, vector<11x32xf32>, vector<8x32xf32> -> vector<8x32xf32>
    %c0_3 = arith.constant 0 : index
    %c0_4 = arith.constant 0 : index
    %3 = vector.load %arg3[%c0_3, %c0_4] : memref<1x32xf32, #tpu.memory_space<vmem>>, vector<1x32xf32>
    %4 = vector.broadcast %3 : vector<1x32xf32> to vector<8x32xf32>
    %5 = arith.addf %2, %4 : vector<8x32xf32>
    %cst_5 = arith.constant 0.000000e+00 : f32
    %6 = vector.broadcast %cst_5 : f32 to vector<8x32xf32>
    %7 = arith.maximumf %5, %6 : vector<8x32xf32>
    %c0_6 = arith.constant 0 : index
    %c0_7 = arith.constant 0 : index
    %8 = vector.load %arg4[%c0_6, %c0_7] : memref<32x32xf32, #tpu.memory_space<vmem>>, vector<32x32xf32>
    %cst_8 = arith.constant dense<0.000000e+00> : vector<8x32xf32>
    %9 = tpu.matmul %7, %8, %cst_8 {dimension_numbers = #tpu.dot_dimension_numbers<[1], [0], [0], [1], [0, 0, 1, 1], [], []>} : vector<8x32xf32>, vector<32x32xf32>, vector<8x32xf32> -> vector<8x32xf32>
    %c0_9 = arith.constant 0 : index
    %c0_10 = arith.constant 0 : index
    %10 = vector.load %arg5[%c0_9, %c0_10] : memref<1x32xf32, #tpu.memory_space<vmem>>, vector<1x32xf32>
    %11 = vector.broadcast %10 : vector<1x32xf32> to vector<8x32xf32>
    %12 = arith.addf %9, %11 : vector<8x32xf32>
    %cst_11 = arith.constant 0.000000e+00 : f32
    %13 = vector.broadcast %cst_11 : f32 to vector<8x32xf32>
    %14 = arith.maximumf %12, %13 : vector<8x32xf32>
    %c0_12 = arith.constant 0 : index
    %c0_13 = arith.constant 0 : index
    %15 = vector.load %arg6[%c0_12, %c0_13] : memref<32x32xf32, #tpu.memory_space<vmem>>, vector<32x32xf32>
    %cst_14 = arith.constant dense<0.000000e+00> : vector<8x32xf32>
    %16 = tpu.matmul %14, %15, %cst_14 {dimension_numbers = #tpu.dot_dimension_numbers<[1], [0], [0], [1], [0, 0, 1, 1], [], []>} : vector<8x32xf32>, vector<32x32xf32>, vector<8x32xf32> -> vector<8x32xf32>
    %c0_15 = arith.constant 0 : index
    %c0_16 = arith.constant 0 : index
    %17 = vector.load %arg7[%c0_15, %c0_16] : memref<1x32xf32, #tpu.memory_space<vmem>>, vector<1x32xf32>
    %18 = vector.broadcast %17 : vector<1x32xf32> to vector<8x32xf32>
    %19 = arith.addf %16, %18 : vector<8x32xf32>
    %cst_17 = arith.constant 0.000000e+00 : f32
    %20 = vector.broadcast %cst_17 : f32 to vector<8x32xf32>
    %21 = arith.maximumf %19, %20 : vector<8x32xf32>
    %c0_18 = arith.constant 0 : index
    %c0_19 = arith.constant 0 : index
    %22 = vector.load %arg4[%c0_18, %c0_19] : memref<32x32xf32, #tpu.memory_space<vmem>>, vector<32x32xf32>
    %cst_20 = arith.constant dense<0.000000e+00> : vector<8x32xf32>
    %23 = tpu.matmul %21, %22, %cst_20 {dimension_numbers = #tpu.dot_dimension_numbers<[1], [0], [0], [1], [0, 0, 1, 1], [], []>} : vector<8x32xf32>, vector<32x32xf32>, vector<8x32xf32> -> vector<8x32xf32>
    %c0_21 = arith.constant 0 : index
    %c0_22 = arith.constant 0 : index
    %24 = vector.load %arg5[%c0_21, %c0_22] : memref<1x32xf32, #tpu.memory_space<vmem>>, vector<1x32xf32>
    %25 = vector.broadcast %24 : vector<1x32xf32> to vector<8x32xf32>
    %26 = arith.addf %23, %25 : vector<8x32xf32>
    %cst_23 = arith.constant 0.000000e+00 : f32
    %27 = vector.broadcast %cst_23 : f32 to vector<8x32xf32>
    %28 = arith.maximumf %26, %27 : vector<8x32xf32>
    %c0_24 = arith.constant 0 : index
    %c0_25 = arith.constant 0 : index
    %29 = vector.load %arg8[%c0_24, %c0_25] : memref<32x4xf32, #tpu.memory_space<vmem>>, vector<32x4xf32>
    %cst_26 = arith.constant dense<0.000000e+00> : vector<8x4xf32>
    %30 = tpu.matmul %28, %29, %cst_26 {dimension_numbers = #tpu.dot_dimension_numbers<[1], [0], [0], [1], [0, 0, 1, 1], [], []>} : vector<8x32xf32>, vector<32x4xf32>, vector<8x4xf32> -> vector<8x4xf32>
    %c0_27 = arith.constant 0 : index
    %c0_28 = arith.constant 0 : index
    %31 = vector.load %arg9[%c0_27, %c0_28] : memref<1x4xf32, #tpu.memory_space<vmem>>, vector<1x4xf32>
    %32 = vector.broadcast %31 : vector<1x4xf32> to vector<8x4xf32>
    %33 = arith.addf %30, %32 : vector<8x4xf32>
    %c0_29 = arith.constant 0 : index
    %c0_30 = arith.constant 0 : index
    %34 = vector.load %arg10[%c0_29, %c0_30] : memref<8x4xf32, #tpu.memory_space<vmem>>, vector<8x4xf32>
    tpu.vector_store %arg10[%c0_29, %c0_30], %33 {strides = array<i32>} : memref<8x4xf32, #tpu.memory_space<vmem>>, vector<8x4xf32>,
    return
  }
  func.func @transform_0(%arg0: i32) -> (i32, i32) {
    %c0_i32 = arith.constant 0 : i32
    %c0_i32_0 = arith.constant 0 : i32
    return %arg0, %c0_i32 : i32, i32
  }
  func.func @transform_1(%arg0: i32) -> (i32, i32) {
    %c0_i32 = arith.constant 0 : i32
    %c0_i32_0 = arith.constant 0 : i32
    %c0_i32_1 = arith.constant 0 : i32
    return %c0_i32, %c0_i32_0 : i32, i32
  }
  func.func @transform_2(%arg0: i32) -> (i32, i32) {
    %c0_i32 = arith.constant 0 : i32
    %c0_i32_0 = arith.constant 0 : i32
    %c0_i32_1 = arith.constant 0 : i32
    return %c0_i32, %c0_i32_0 : i32, i32
  }
  func.func @transform_3(%arg0: i32) -> (i32, i32) {
    %c0_i32 = arith.constant 0 : i32
    %c0_i32_0 = arith.constant 0 : i32
    %c0_i32_1 = arith.constant 0 : i32
    return %c0_i32, %c0_i32_0 : i32, i32
  }
  func.func @transform_4(%arg0: i32) -> (i32, i32) {
    %c0_i32 = arith.constant 0 : i32
    %c0_i32_0 = arith.constant 0 : i32
    %c0_i32_1 = arith.constant 0 : i32
    return %c0_i32, %c0_i32_0 : i32, i32
  }
  func.func @transform_5(%arg0: i32) -> (i32, i32) {
    %c0_i32 = arith.constant 0 : i32
    %c0_i32_0 = arith.constant 0 : i32
    %c0_i32_1 = arith.constant 0 : i32
    return %c0_i32, %c0_i32_0 : i32, i32
  }
  func.func @transform_6(%arg0: i32) -> (i32, i32) {
    %c0_i32 = arith.constant 0 : i32
    %c0_i32_0 = arith.constant 0 : i32
    %c0_i32_1 = arith.constant 0 : i32
    return %c0_i32, %c0_i32_0 : i32, i32
  }
  func.func @transform_7(%arg0: i32) -> (i32, i32) {
    %c0_i32 = arith.constant 0 : i32
    %c0_i32_0 = arith.constant 0 : i32
    %c0_i32_1 = arith.constant 0 : i32
    return %c0_i32, %c0_i32_0 : i32, i32
  }
  func.func @transform_8(%arg0: i32) -> (i32, i32) {
    %c0_i32 = arith.constant 0 : i32
    %c0_i32_0 = arith.constant 0 : i32
    %c0_i32_1 = arith.constant 0 : i32
    return %c0_i32, %c0_i32_0 : i32, i32
  }
  func.func @transform_9(%arg0: i32) -> (i32, i32) {
    %c0_i32 = arith.constant 0 : i32
    %c0_i32_0 = arith.constant 0 : i32
    return %arg0, %c0_i32 : i32, i32
  }
}

</mosaic_0001>

<llo_original>
// kernel: tpu_custom_call.1
$region0: #{tpu_custom_call.1}
  #allocation0 [shape = 'u32[]', space=smem, size = 0x4, offset = 0x4, fixed_abs, tag = 'smem constant byte address 0x4 - core index']
  #allocation1 [shape = 'u32[144,128]{1,0:T(1,128)}', space=vmem, size = 0x12000, scoped, tag = 'internal scratch']
  %s0 = inlined_call_operand.vmem [shape: f32[8,11], index: 0, kind: input, shape index: {}]
  %s1 = inlined_call_operand.hbm [shape: f32[11,32], index: 1, kind: input, shape index: {}]
  %s2 = inlined_call_operand.vmem [shape: f32[1,32], index: 2, kind: input, shape index: {}]
  %s3 = inlined_call_operand.vmem [shape: f32[32,32], index: 3, kind: input, shape index: {}]
  %s4 = inlined_call_operand.vmem [shape: f32[1,32], index: 4, kind: input, shape index: {}]
  %s5 = inlined_call_operand.hbm [shape: f32[32,32], index: 5, kind: input, shape index: {}]
  %s6 = inlined_call_operand.vmem [shape: f32[1,32], index: 6, kind: input, shape index: {}]
  %s7 = inlined_call_operand.vmem [shape: f32[32,4], index: 7, kind: input, shape index: {}]
  %s8 = inlined_call_operand.vmem [shape: f32[1,4], index: 8, kind: input, shape index: {}]
  %s9 = inlined_call_operand.vmem [shape: f32[8,4], index: 9, kind: output, shape index: {}]
  %s10 = sld [smem:[#allocation0]]
  $region54: #{tpu_custom_call.1} parent=0
    _
  %s12 = ssub.s32 1, %s10
  %s13 = scalar_select 0, %s12, %s10
  $region1: #{tpu_custom_call.1} parent=0
    #allocation2 [shape = 'u8[8192]{0}', space=vmem, size = 0x2000, scoped, tag = 'input window, operand 1, single buffered']
    #allocation3 [shape = 's32[1]{0}', space=sflag, size = 0x4, scoped, tag = 'scoped memory for tpu_custom_call.1']
    #allocation4 [shape = 'u8[16384]{0}', space=vmem, size = 0x4000, scoped, tag = 'input window, operand 5, single buffered']
    #allocation5 [shape = 's32[1]{0}', space=sflag, size = 0x4, scoped, tag = 'scoped memory for tpu_custom_call.1']
    %14 = vsyncpa [#allocation3], 0
    %15 = vsyncpa [#allocation5], 0
    // Predicated region
    $region2: #{tpu_custom_call.1} parent=1 // pred_check
      _
    $region3: #{tpu_custom_call.1} parent=1 // pred_check_branch
      %17 = sbr.rel (0) target = $region5
    $region4: #{tpu_custom_call.1} parent=1 // pred_region
      _
    $region5: #{tpu_custom_call.1} parent=1 // pred_fallthru
      _
    // Predicated region
    $region6: #{tpu_custom_call.1} parent=1 // pred_check
      _
    $region7: #{tpu_custom_call.1} parent=1 // pred_check_branch
      %19 = sbr.rel (0) target = $region9
    $region8: #{tpu_custom_call.1} parent=1 // pred_region
      %s21 = ssub.s32 256, 256
      %22 = vsyncadd [#allocation3], %s21
      %s23 = sshll.u32 [#allocation2], 4
      %s24 = int_to_ptr.vmem [resolvable:$true] %s23
      %29 = dma.hbm_to_vmem [thread:$0]  %s1, 256, %s24, [#allocation3], 128, 128, 8
    $region9: #{tpu_custom_call.1} parent=1 // pred_fallthru
      _
    // Predicated region
    $region10: #{tpu_custom_call.1} parent=1 // pred_check
      _
    $region11: #{tpu_custom_call.1} parent=1 // pred_check_branch
      %31 = sbr.rel (0) target = $region13
    $region12: #{tpu_custom_call.1} parent=1 // pred_region
      _
    $region13: #{tpu_custom_call.1} parent=1 // pred_fallthru
      _
    // Predicated region
    $region14: #{tpu_custom_call.1} parent=1 // pred_check
      _
    $region15: #{tpu_custom_call.1} parent=1 // pred_check_branch
      %33 = sbr.rel (0) target = $region17
    $region16: #{tpu_custom_call.1} parent=1 // pred_region
      _
    $region17: #{tpu_custom_call.1} parent=1 // pred_fallthru
      _
    // Predicated region
    $region18: #{tpu_custom_call.1} parent=1 // pred_check
      _
    $region19: #{tpu_custom_call.1} parent=1 // pred_check_branch
      %35 = sbr.rel (0) target = $region21
    $region20: #{tpu_custom_call.1} parent=1 // pred_region
      _
    $region21: #{tpu_custom_call.1} parent=1 // pred_fallthru
      _
    // Predicated region
    $region22: #{tpu_custom_call.1} parent=1 // pred_check
      _
    $region23: #{tpu_custom_call.1} parent=1 // pred_check_branch
      %37 = sbr.rel (0) target = $region25
    $region24: #{tpu_custom_call.1} parent=1 // pred_region
      %s39 = ssub.s32 512, 512
      %40 = vsyncadd [#allocation5], %s39
      %s41 = sshll.u32 [#allocation4], 4
      %s42 = int_to_ptr.vmem [resolvable:$true] %s41
      %47 = dma.hbm_to_vmem [thread:$0]  %s5, 512, %s42, [#allocation5], 128, 128, 8
    $region25: #{tpu_custom_call.1} parent=1 // pred_fallthru
      _
    // Predicated region
    $region26: #{tpu_custom_call.1} parent=1 // pred_check
      _
    $region27: #{tpu_custom_call.1} parent=1 // pred_check_branch
      %49 = sbr.rel (0) target = $region29
    $region28: #{tpu_custom_call.1} parent=1 // pred_region
      _
    $region29: #{tpu_custom_call.1} parent=1 // pred_fallthru
      _
    // Predicated region
    $region30: #{tpu_custom_call.1} parent=1 // pred_check
      _
    $region31: #{tpu_custom_call.1} parent=1 // pred_check_branch
      %51 = sbr.rel (0) target = $region33
    $region32: #{tpu_custom_call.1} parent=1 // pred_region
      _
    $region33: #{tpu_custom_call.1} parent=1 // pred_fallthru
      _
    // Predicated region
    $region34: #{tpu_custom_call.1} parent=1 // pred_check
      _
    $region35: #{tpu_custom_call.1} parent=1 // pred_check_branch
      %53 = sbr.rel (0) target = $region37
    $region36: #{tpu_custom_call.1} parent=1 // pred_region
      _
    $region37: #{tpu_custom_call.1} parent=1 // pred_fallthru
      _
    // Predicated region
    $region38: #{tpu_custom_call.1} parent=1 // pred_check
      _
    $region39: #{tpu_custom_call.1} parent=1 // pred_check_branch
      %55 = sbr.rel (0) target = $region41
    $region40: #{tpu_custom_call.1} parent=1 // pred_region
      %56 = dma.done [#allocation3], 256
    $region41: #{tpu_custom_call.1} parent=1 // pred_fallthru
      _
    // Predicated region
    $region42: #{tpu_custom_call.1} parent=1 // pred_check
      _
    $region43: #{tpu_custom_call.1} parent=1 // pred_check_branch
      %58 = sbr.rel (0) target = $region45
    $region44: #{tpu_custom_call.1} parent=1 // pred_region
      %59 = dma.done [#allocation5], 512
    $region45: #{tpu_custom_call.1} parent=1 // pred_fallthru
      _
    %v60 = vld [vmem:[%s0] sm:$0xff]
    %v61 = vld [vmem:[#allocation2] sm:$0xff]
    %v62 = vld [vmem:[#allocation2 + $0x8] sm:$0x7]
    %v63 = vld [vmem:[%s2] sm:$0x1]
    %v65 = vlaneseq
    %v66 = vshrl.u32 %v65, 7
    %v67 = vsub.s32 0, %v66
    %v68 = vrot.slane %v63, %v67
    %vm70 = vcmask 89088
    %v72 = vsel %vm70, %v60, 0
    %vm74 = vcmask 1042432
    %v76 = vsel %vm74, %v62, 0
    %78 = vmatprep.subr.mxu0 0.0
    %79 = vmatpush1.msra.mxu0 %v61
    %80 = vmatprep.subr.mxu0 0.0
    %81 = vmatpush1.msra.mxu0 %v76
    %82 = vmatprep.subr.mxu0 0.0
    %83 = vmatpush1.msra.mxu0 0.0
    %84 = vmatprep.subr.mxu0 0.0
    %85 = vmatpush1.msra.mxu0 0.0
    %86 = vmatprep.subr.mxu0 0.0
    %87 = vmatpush1.msra.mxu0 0.0
    %88 = vmatprep.subr.mxu0 0.0
    %89 = vmatpush1.msra.mxu0 0.0
    %90 = vmatprep.subr.mxu0 0.0
    %91 = vmatpush1.msra.mxu0 0.0
    %92 = vmatprep.subr.mxu0 0.0
    %93 = vmatpush1.msra.mxu0 0.0
    %94 = vmatprep.subr.mxu0 0.0
    %95 = vmatpush1.msra.mxu0 0.0
    %96 = vmatprep.subr.mxu0 0.0
    %97 = vmatpush1.msra.mxu0 0.0
    %98 = vmatprep.subr.mxu0 0.0
    %99 = vmatpush1.msra.mxu0 0.0
    %100 = vmatprep.subr.mxu0 0.0
    %101 = vmatpush1.msra.mxu0 0.0
    %102 = vmatprep.subr.mxu0 0.0
    %103 = vmatpush1.msra.mxu0 0.0
    %104 = vmatprep.subr.mxu0 0.0
    %105 = vmatpush1.msra.mxu0 0.0
    %106 = vmatprep.subr.mxu0 0.0
    %107 = vmatpush1.msra.mxu0 0.0
    %108 = vmatprep.subr.mxu0 0.0
    %109 = vmatpush1.msra.mxu0 0.0
    %110 = vmatprep.subr.mxu0 0.0
    %111 = vmatpush1.msra.mxu0 0.0
    %112 = vmatprep.subr.mxu0 0.0
    %113 = vmatpush1.msra.mxu0 0.0
    %114 = vmatprep.subr.mxu0 0.0
    %115 = vmatpush1.msra.mxu0 0.0
    %116 = vmatprep.subr.mxu0 0.0
    %117 = vmatpush1.msra.mxu0 0.0
    %118 = vmatprep.subr.mxu0 0.0
    %119 = vmatpush1.msra.mxu0 0.0
    %120 = vmatprep.subr.mxu0 0.0
    %121 = vmatpush1.msra.mxu0 0.0
    %122 = vmatprep.subr.mxu0 0.0
    %123 = vmatpush1.msra.mxu0 0.0
    %124 = vmatprep.subr.mxu0 0.0
    %125 = vmatpush1.msra.mxu0 0.0
    %126 = vmatprep.subr.mxu0 0.0
    %127 = vmatpush1.msra.mxu0 0.0
    %128 = vmatprep.subr.mxu0 0.0
    %129 = vmatpush1.msra.mxu0 0.0
    %130 = vmatprep.subr.mxu0 0.0
    %131 = vmatpush1.msra.mxu0 0.0
    %132 = vmatprep.subr.mxu0 0.0
    %133 = vmatpush1.msra.mxu0 0.0
    %134 = vmatprep.subr.mxu0 0.0
    %135 = vmatpush1.msra.mxu0 0.0
    %136 = vmatprep.subr.mxu0 0.0
    %137 = vmatpush1.msra.mxu0 0.0
    %138 = vmatprep.subr.mxu0 0.0
    %139 = vmatpush1.msra.mxu0 0.0
    %140 = vmatprep.subr.mxu0 0.0
    %141 = vmatpush1.msra.mxu0 0.0
    %142 = vmatprep.mubr.f32.mxu0 0.0
    %143 = vmatmul.mubr.f32.gmra.mrb[0].mxu0 %v72
    %v144 = vpop.f32.mrb[0].mxu0
    %v145 = vadd.f32 %v68, %v144
    %v146 = vpop.f32.mrb[0].mxu0
    %147 = vdwg.mxu0
    %v148 = vmax.f32 %v145, 0.0
    %v149 = vld [vmem:[%s3] sm:$0xff]
    %v150 = vld [vmem:[%s3 + $0x8] sm:$0xff]
    %v151 = vld [vmem:[%s3 + $0x10] sm:$0xff]
    %v152 = vld [vmem:[%s3 + $0x18] sm:$0xff]
    %v153 = vld [vmem:[%s4] sm:$0x1]
    %v155 = vlaneseq
    %v156 = vshrl.u32 %v155, 7
    %v157 = vsub.s32 0, %v156
    %v158 = vrot.slane %v153, %v157
    %vm160 = vcmask 261120
    %v162 = vsel %vm160, %v148, 0
    %164 = vmatprep.subr.mxu0 0.0
    %165 = vmatpush1.msra.mxu0 %v149
    %166 = vmatprep.subr.mxu0 0.0
    %167 = vmatpush1.msra.mxu0 %v150
    %168 = vmatprep.subr.mxu0 0.0
    %169 = vmatpush1.msra.mxu0 %v151
    %170 = vmatprep.subr.mxu0 0.0
    %171 = vmatpush1.msra.mxu0 %v152
    %172 = vmatprep.subr.mxu0 0.0
    %173 = vmatpush1.msra.mxu0 0.0
    %174 = vmatprep.subr.mxu0 0.0
    %175 = vmatpush1.msra.mxu0 0.0
    %176 = vmatprep.subr.mxu0 0.0
    %177 = vmatpush1.msra.mxu0 0.0
    %178 = vmatprep.subr.mxu0 0.0
    %179 = vmatpush1.msra.mxu0 0.0
    %180 = vmatprep.subr.mxu0 0.0
    %181 = vmatpush1.msra.mxu0 0.0
    %182 = vmatprep.subr.mxu0 0.0
    %183 = vmatpush1.msra.mxu0 0.0
    %184 = vmatprep.subr.mxu0 0.0
    %185 = vmatpush1.msra.mxu0 0.0
    %186 = vmatprep.subr.mxu0 0.0
    %187 = vmatpush1.msra.mxu0 0.0
    %188 = vmatprep.subr.mxu0 0.0
    %189 = vmatpush1.msra.mxu0 0.0
    %190 = vmatprep.subr.mxu0 0.0
    %191 = vmatpush1.msra.mxu0 0.0
    %192 = vmatprep.subr.mxu0 0.0
    %193 = vmatpush1.msra.mxu0 0.0
    %194 = vmatprep.subr.mxu0 0.0
    %195 = vmatpush1.msra.mxu0 0.0
    %196 = vmatprep.subr.mxu0 0.0
    %197 = vmatpush1.msra.mxu0 0.0
    %198 = vmatprep.subr.mxu0 0.0
    %199 = vmatpush1.msra.mxu0 0.0
    %200 = vmatprep.subr.mxu0 0.0
    %201 = vmatpush1.msra.mxu0 0.0
    %202 = vmatprep.subr.mxu0 0.0
    %203 = vmatpush1.msra.mxu0 0.0
    %204 = vmatprep.subr.mxu0 0.0
    %205 = vmatpush1.msra.mxu0 0.0
    %206 = vmatprep.subr.mxu0 0.0
    %207 = vmatpush1.msra.mxu0 0.0
    %208 = vmatprep.subr.mxu0 0.0
    %209 = vmatpush1.msra.mxu0 0.0
    %210 = vmatprep.subr.mxu0 0.0
    %211 = vmatpush1.msra.mxu0 0.0
    %212 = vmatprep.subr.mxu0 0.0
    %213 = vmatpush1.msra.mxu0 0.0
    %214 = vmatprep.subr.mxu0 0.0
    %215 = vmatpush1.msra.mxu0 0.0
    %216 = vmatprep.subr.mxu0 0.0
    %217 = vmatpush1.msra.mxu0 0.0
    %218 = vmatprep.subr.mxu0 0.0
    %219 = vmatpush1.msra.mxu0 0.0
    %220 = vmatprep.subr.mxu0 0.0
    %221 = vmatpush1.msra.mxu0 0.0
    %222 = vmatprep.subr.mxu0 0.0
    %223 = vmatpush1.msra.mxu0 0.0
    %224 = vmatprep.subr.mxu0 0.0
    %225 = vmatpush1.msra.mxu0 0.0
    %226 = vmatprep.subr.mxu0 0.0
    %227 = vmatpush1.msra.mxu0 0.0
    %228 = vmatprep.mubr.f32.mxu0 0.0
    %229 = vmatmul.mubr.f32.gmra.mrb[0].mxu0 %v162
    %v230 = vpop.f32.mrb[0].mxu0
    %v231 = vadd.f32 %v158, %v230
    %v232 = vpop.f32.mrb[0].mxu0
    %233 = vdwg.mxu0
    %v234 = vmax.f32 %v231, 0.0
    %v235 = vld [vmem:[#allocation4] sm:$0xff]
    %v236 = vld [vmem:[#allocation4 + $0x8] sm:$0xff]
    %v237 = vld [vmem:[#allocation4 + $0x10] sm:$0xff]
    %v238 = vld [vmem:[#allocation4 + $0x18] sm:$0xff]
    %v239 = vld [vmem:[%s6] sm:$0x1]
    %v241 = vlaneseq
    %v242 = vshrl.u32 %v241, 7
    %v243 = vsub.s32 0, %v242
    %v244 = vrot.slane %v239, %v243
    %v247 = vsel %vm160, %v234, 0
    %249 = vmatprep.subr.mxu0 0.0
    %250 = vmatpush1.msra.mxu0 %v235
    %251 = vmatprep.subr.mxu0 0.0
    %252 = vmatpush1.msra.mxu0 %v236
    %253 = vmatprep.subr.mxu0 0.0
    %254 = vmatpush1.msra.mxu0 %v237
    %255 = vmatprep.subr.mxu0 0.0
    %256 = vmatpush1.msra.mxu0 %v238
    %257 = vmatprep.subr.mxu0 0.0
    %258 = vmatpush1.msra.mxu0 0.0
    %259 = vmatprep.subr.mxu0 0.0
    %260 = vmatpush1.msra.mxu0 0.0
    %261 = vmatprep.subr.mxu0 0.0
    %262 = vmatpush1.msra.mxu0 0.0
    %263 = vmatprep.subr.mxu0 0.0
    %264 = vmatpush1.msra.mxu0 0.0
    %265 = vmatprep.subr.mxu0 0.0
    %266 = vmatpush1.msra.mxu0 0.0
    %267 = vmatprep.subr.mxu0 0.0
    %268 = vmatpush1.msra.mxu0 0.0
    %269 = vmatprep.subr.mxu0 0.0
    %270 = vmatpush1.msra.mxu0 0.0
    %271 = vmatprep.subr.mxu0 0.0
    %272 = vmatpush1.msra.mxu0 0.0
    %273 = vmatprep.subr.mxu0 0.0
    %274 = vmatpush1.msra.mxu0 0.0
    %275 = vmatprep.subr.mxu0 0.0
    %276 = vmatpush1.msra.mxu0 0.0
    %277 = vmatprep.subr.mxu0 0.0
    %278 = vmatpush1.msra.mxu0 0.0
    %279 = vmatprep.subr.mxu0 0.0
    %280 = vmatpush1.msra.mxu0 0.0
    %281 = vmatprep.subr.mxu0 0.0
    %282 = vmatpush1.msra.mxu0 0.0
    %283 = vmatprep.subr.mxu0 0.0
    %284 = vmatpush1.msra.mxu0 0.0
    %285 = vmatprep.subr.mxu0 0.0
    %286 = vmatpush1.msra.mxu0 0.0
    %287 = vmatprep.subr.mxu0 0.0
    %288 = vmatpush1.msra.mxu0 0.0
    %289 = vmatprep.subr.mxu0 0.0
    %290 = vmatpush1.msra.mxu0 0.0
    %291 = vmatprep.subr.mxu0 0.0
    %292 = vmatpush1.msra.mxu0 0.0
    %293 = vmatprep.subr.mxu0 0.0
    %294 = vmatpush1.msra.mxu0 0.0
    %295 = vmatprep.subr.mxu0 0.0
    %296 = vmatpush1.msra.mxu0 0.0
    %297 = vmatprep.subr.mxu0 0.0
    %298 = vmatpush1.msra.mxu0 0.0
    %299 = vmatprep.subr.mxu0 0.0
    %300 = vmatpush1.msra.mxu0 0.0
    %301 = vmatprep.subr.mxu0 0.0
    %302 = vmatpush1.msra.mxu0 0.0
    %303 = vmatprep.subr.mxu0 0.0
    %304 = vmatpush1.msra.mxu0 0.0
    %305 = vmatprep.subr.mxu0 0.0
    %306 = vmatpush1.msra.mxu0 0.0
    %307 = vmatprep.subr.mxu0 0.0
    %308 = vmatpush1.msra.mxu0 0.0
    %309 = vmatprep.subr.mxu0 0.0
    %310 = vmatpush1.msra.mxu0 0.0
    %311 = vmatprep.subr.mxu0 0.0
    %312 = vmatpush1.msra.mxu0 0.0
    %313 = vmatprep.mubr.f32.mxu0 0.0
    %314 = vmatmul.mubr.f32.gmra.mrb[0].mxu0 %v247
    %v315 = vpop.f32.mrb[0].mxu0
    %v316 = vadd.f32 %v244, %v315
    %v317 = vpop.f32.mrb[0].mxu0
    %318 = vdwg.mxu0
    %v319 = vmax.f32 %v316, 0.0
    %v321 = vsel %vm160, %v319, 0
    %323 = vmatprep.subr.mxu0 0.0
    %324 = vmatpush1.msra.mxu0 %v149
    %325 = vmatprep.subr.mxu0 0.0
    %326 = vmatpush1.msra.mxu0 %v150
    %327 = vmatprep.subr.mxu0 0.0
    %328 = vmatpush1.msra.mxu0 %v151
    %329 = vmatprep.subr.mxu0 0.0
    %330 = vmatpush1.msra.mxu0 %v152
    %331 = vmatprep.subr.mxu0 0.0
    %332 = vmatpush1.msra.mxu0 0.0
    %333 = vmatprep.subr.mxu0 0.0
    %334 = vmatpush1.msra.mxu0 0.0
    %335 = vmatprep.subr.mxu0 0.0
    %336 = vmatpush1.msra.mxu0 0.0
    %337 = vmatprep.subr.mxu0 0.0
    %338 = vmatpush1.msra.mxu0 0.0
    %339 = vmatprep.subr.mxu0 0.0
    %340 = vmatpush1.msra.mxu0 0.0
    %341 = vmatprep.subr.mxu0 0.0
    %342 = vmatpush1.msra.mxu0 0.0
    %343 = vmatprep.subr.mxu0 0.0
    %344 = vmatpush1.msra.mxu0 0.0
    %345 = vmatprep.subr.mxu0 0.0
    %346 = vmatpush1.msra.mxu0 0.0
    %347 = vmatprep.subr.mxu0 0.0
    %348 = vmatpush1.msra.mxu0 0.0
    %349 = vmatprep.subr.mxu0 0.0
    %350 = vmatpush1.msra.mxu0 0.0
    %351 = vmatprep.subr.mxu0 0.0
    %352 = vmatpush1.msra.mxu0 0.0
    %353 = vmatprep.subr.mxu0 0.0
    %354 = vmatpush1.msra.mxu0 0.0
    %355 = vmatprep.subr.mxu0 0.0
    %356 = vmatpush1.msra.mxu0 0.0
    %357 = vmatprep.subr.mxu0 0.0
    %358 = vmatpush1.msra.mxu0 0.0
    %359 = vmatprep.subr.mxu0 0.0
    %360 = vmatpush1.msra.mxu0 0.0
    %361 = vmatprep.subr.mxu0 0.0
    %362 = vmatpush1.msra.mxu0 0.0
    %363 = vmatprep.subr.mxu0 0.0
    %364 = vmatpush1.msra.mxu0 0.0
    %365 = vmatprep.subr.mxu0 0.0
    %366 = vmatpush1.msra.mxu0 0.0
    %367 = vmatprep.subr.mxu0 0.0
    %368 = vmatpush1.msra.mxu0 0.0
    %369 = vmatprep.subr.mxu0 0.0
    %370 = vmatpush1.msra.mxu0 0.0
    %371 = vmatprep.subr.mxu0 0.0
    %372 = vmatpush1.msra.mxu0 0.0
    %373 = vmatprep.subr.mxu0 0.0
    %374 = vmatpush1.msra.mxu0 0.0
    %375 = vmatprep.subr.mxu0 0.0
    %376 = vmatpush1.msra.mxu0 0.0
    %377 = vmatprep.subr.mxu0 0.0
    %378 = vmatpush1.msra.mxu0 0.0
    %379 = vmatprep.subr.mxu0 0.0
    %380 = vmatpush1.msra.mxu0 0.0
    %381 = vmatprep.subr.mxu0 0.0
    %382 = vmatpush1.msra.mxu0 0.0
    %383 = vmatprep.subr.mxu0 0.0
    %384 = vmatpush1.msra.mxu0 0.0
    %385 = vmatprep.subr.mxu0 0.0
    %386 = vmatpush1.msra.mxu0 0.0
    %387 = vmatprep.mubr.f32.mxu0 0.0
    %388 = vmatmul.mubr.f32.gmra.mrb[0].mxu0 %v321
    %v389 = vpop.f32.mrb[0].mxu0
    %v390 = vadd.f32 %v158, %v389
    %v391 = vpop.f32.mrb[0].mxu0
    %392 = vdwg.mxu0
    %v393 = vmax.f32 %v390, 0.0
    %v394 = vld [vmem:[%s7] sm:$0xff]
    %v395 = vld [vmem:[%s7 + $0x8] sm:$0xff]
    %v396 = vld [vmem:[%s7 + $0x10] sm:$0xff]
    %v397 = vld [vmem:[%s7 + $0x18] sm:$0xff]
    %v398 = vld [vmem:[%s8] sm:$0x1]
    %v400 = vlaneseq
    %v401 = vshrl.u32 %v400, 7
    %v402 = vsub.s32 0, %v401
    %v403 = vrot.slane %v398, %v402
    %v406 = vsel %vm160, %v393, 0
    %408 = vmatprep.subr.mxu0 0.0
    %409 = vmatpush1.msra.mxu0 %v394
    %410 = vmatprep.subr.mxu0 0.0
    %411 = vmatpush1.msra.mxu0 %v395
    %412 = vmatprep.subr.mxu0 0.0
    %413 = vmatpush1.msra.mxu0 %v396
    %414 = vmatprep.subr.mxu0 0.0
    %415 = vmatpush1.msra.mxu0 %v397
    %416 = vmatprep.subr.mxu0 0.0
    %417 = vmatpush1.msra.mxu0 0.0
    %418 = vmatprep.subr.mxu0 0.0
    %419 = vmatpush1.msra.mxu0 0.0
    %420 = vmatprep.subr.mxu0 0.0
    %421 = vmatpush1.msra.mxu0 0.0
    %422 = vmatprep.subr.mxu0 0.0
    %423 = vmatpush1.msra.mxu0 0.0
    %424 = vmatprep.subr.mxu0 0.0
    %425 = vmatpush1.msra.mxu0 0.0
    %426 = vmatprep.subr.mxu0 0.0
    %427 = vmatpush1.msra.mxu0 0.0
    %428 = vmatprep.subr.mxu0 0.0
    %429 = vmatpush1.msra.mxu0 0.0
    %430 = vmatprep.subr.mxu0 0.0
    %431 = vmatpush1.msra.mxu0 0.0
    %432 = vmatprep.subr.mxu0 0.0
    %433 = vmatpush1.msra.mxu0 0.0
    %434 = vmatprep.subr.mxu0 0.0
    %435 = vmatpush1.msra.mxu0 0.0
    %436 = vmatprep.subr.mxu0 0.0
    %437 = vmatpush1.msra.mxu0 0.0
    %438 = vmatprep.subr.mxu0 0.0
    %439 = vmatpush1.msra.mxu0 0.0
    %440 = vmatprep.subr.mxu0 0.0
    %441 = vmatpush1.msra.mxu0 0.0
    %442 = vmatprep.subr.mxu0 0.0
    %443 = vmatpush1.msra.mxu0 0.0
    %444 = vmatprep.subr.mxu0 0.0
    %445 = vmatpush1.msra.mxu0 0.0
    %446 = vmatprep.subr.mxu0 0.0
    %447 = vmatpush1.msra.mxu0 0.0
    %448 = vmatprep.subr.mxu0 0.0
    %449 = vmatpush1.msra.mxu0 0.0
    %450 = vmatprep.subr.mxu0 0.0
    %451 = vmatpush1.msra.mxu0 0.0
    %452 = vmatprep.subr.mxu0 0.0
    %453 = vmatpush1.msra.mxu0 0.0
    %454 = vmatprep.subr.mxu0 0.0
    %455 = vmatpush1.msra.mxu0 0.0
    %456 = vmatprep.subr.mxu0 0.0
    %457 = vmatpush1.msra.mxu0 0.0
    %458 = vmatprep.subr.mxu0 0.0
    %459 = vmatpush1.msra.mxu0 0.0
    %460 = vmatprep.subr.mxu0 0.0
    %461 = vmatpush1.msra.mxu0 0.0
    %462 = vmatprep.subr.mxu0 0.0
    %463 = vmatpush1.msra.mxu0 0.0
    %464 = vmatprep.subr.mxu0 0.0
    %465 = vmatpush1.msra.mxu0 0.0
    %466 = vmatprep.subr.mxu0 0.0
    %467 = vmatpush1.msra.mxu0 0.0
    %468 = vmatprep.subr.mxu0 0.0
    %469 = vmatpush1.msra.mxu0 0.0
    %470 = vmatprep.subr.mxu0 0.0
    %471 = vmatpush1.msra.mxu0 0.0
    %472 = vmatprep.mubr.f32.mxu0 0.0
    %473 = vmatmul.mubr.f32.gmra.mrb[0].mxu0 %v406
    %v474 = vpop.f32.mrb[0].mxu0
    %v475 = vadd.f32 %v403, %v474
    %v476 = vpop.f32.mrb[0].mxu0
    %477 = vdwg.mxu0
    %vm478 = vcmask 31744
    %479 = vst.msk [vmem:[%s9] sm:$0xff] %vm478, %v475
    // Predicated region
    $region46: #{tpu_custom_call.1} parent=1 // pred_check
      _
    $region47: #{tpu_custom_call.1} parent=1 // pred_check_branch
      %481 = sbr.rel (0) target = $region49
    $region48: #{tpu_custom_call.1} parent=1 // pred_region
      _
    $region49: #{tpu_custom_call.1} parent=1 // pred_fallthru
      _
    // Predicated region
    $region50: #{tpu_custom_call.1} parent=1 // pred_check
      _
    $region51: #{tpu_custom_call.1} parent=1 // pred_check_branch
      %483 = sbr.rel (0) target = $region53
    $region52: #{tpu_custom_call.1} parent=1 // pred_region
      _
    $region53: #{tpu_custom_call.1} parent=1 // pred_fallthru
      _
    %484 = vsyncpa [#allocation3], 1
    %485 = vsyncpa [#allocation5], 1

</llo_original>
